<compile_context>
chip_gen: v7x
topology: tpu7x:2x2x1
jax: 0.10.0
libtpu: 0.0.40
codegen_flags: <defaults>
</compile_context>

<pallas_src>
import functools

import jax
import jax.numpy as jnp
from jax import lax
from jax.experimental import pallas as pl
from jax.experimental.pallas import tpu as pltpu

MATMUL_DTYPE = jnp.bfloat16   # MXU-native operand dtype; accumulate in f32
TIME_BLOCK = 256              # timesteps processed per grid step (clamped to S)


def _lstm_recurrence_kernel(gx_ref, whh_ref, out_ref, h_ref, c_ref, *,
                            hid_dim, seq_len, block_t):
    """LSTM recurrence over one time-block.  Grid axis 0 = time block (serial).

    gx_ref  : (block_t, B, 4H) f32  precomputed x_t @ W_ih^T + b  (hoisted proj)
    whh_ref : (H, 4H)          bf16 recurrent weights (constant over grid)
    out_ref : (block_t, B, H)  f32  per-step hidden outputs (next layer input)
    h_ref   : (B, H)           f32  carried hidden state (constant block index
                                    => VMEM-resident across grid steps)
    c_ref   : (B, H)           f32  carried cell state (same)
    """
    tb = pl.program_id(0)

    @pl.when(tb == 0)
    def _():
        h_ref[...] = jnp.zeros_like(h_ref)
        c_ref[...] = jnp.zeros_like(c_ref)

    w_hh = whh_ref[...]                           # loaded once per time block
    H = hid_dim

    if seq_len % block_t == 0:
        n_valid = block_t                         # static trip count
    else:
        n_valid = jnp.minimum(block_t, seq_len - tb * block_t)

    def step(t, carry):
        h, c = carry                              # f32 (B, H)
        # Only the recurrent projection stays in the serial loop (bf16 MXU,
        # f32 accumulate); the input projection was hoisted outside.
        gates = gx_ref[t] + jnp.dot(h.astype(w_hh.dtype), w_hh,
                                    preferred_element_type=jnp.float32)  # (B,4H)
        # NOTE: with H < 128 these slices are lane-masked; pad H to 128 for
        # realistic sizes to keep the elementwise path pure VPU.
        i_g = jax.nn.sigmoid(gates[:, 0 * H:1 * H])
        f_g = jax.nn.sigmoid(gates[:, 1 * H:2 * H])
        g_g = jnp.tanh(gates[:, 2 * H:3 * H])
        o_g = jax.nn.sigmoid(gates[:, 3 * H:4 * H])
        c_new = f_g * c + i_g * g_g
        h_new = o_g * jnp.tanh(c_new)
        out_ref[t] = h_new.astype(out_ref.dtype)
        return h_new, c_new

    h_fin, c_fin = lax.fori_loop(0, n_valid, step, (h_ref[...], c_ref[...]))
    h_ref[...] = h_fin
    c_ref[...] = c_fin


def lstm_layer(x, w_ih_t, w_hh_t, bias):
    """One LSTM layer over the full sequence.

    x:      (S, B, E) f32
    w_ih_t: (E, 4H)   f32   (transposed PyTorch weight_ih)
    w_hh_t: (H, 4H)   f32   (transposed PyTorch weight_hh)
    bias:   (4H,)     f32   (b_ih + b_hh)
    returns (outputs (S, B, H), h_final (B, H), c_final (B, H)), all f32.
    """
    S, B, E = x.shape
    H = w_hh_t.shape[0]

    # ---- Hoisted input projection: ONE whole-sequence GEMM (bf16 in, f32 out),
    # bias folded in here so the recurrent loop has no per-step bias add.
    gates_x = jnp.dot(x.reshape(S * B, E).astype(MATMUL_DTYPE),
                      w_ih_t.astype(MATMUL_DTYPE),
                      preferred_element_type=jnp.float32)
    gates_x = gates_x.reshape(S, B, 4 * H) + bias

    block_t = min(S, TIME_BLOCK)
    grid = (pl.cdiv(S, block_t),)

    kernel = functools.partial(_lstm_recurrence_kernel,
                               hid_dim=H, seq_len=S, block_t=block_t)

    grid_spec = pltpu.PrefetchScalarGridSpec(
        num_scalar_prefetch=0,
        grid=grid,
        in_specs=[
            pl.BlockSpec((block_t, B, 4 * H), lambda tb: (tb, 0, 0)),
            pl.BlockSpec((H, 4 * H), lambda tb: (0, 0)),
        ],
        out_specs=[
            pl.BlockSpec((block_t, B, H), lambda tb: (tb, 0, 0)),
            pl.BlockSpec((B, H), lambda tb: (0, 0)),
            pl.BlockSpec((B, H), lambda tb: (0, 0)),
        ],
    )

    outputs, h_fin, c_fin = pl.pallas_call(
        kernel,
        out_shape=(
            jax.ShapeDtypeStruct((S, B, H), jnp.float32),
            jax.ShapeDtypeStruct((B, H), jnp.float32),
            jax.ShapeDtypeStruct((B, H), jnp.float32),
        ),
        grid_spec=grid_spec,
        compiler_params=pltpu.CompilerParams(
            dimension_semantics=("arbitrary",)),
    )(gates_x, w_hh_t.astype(MATMUL_DTYPE))
    return outputs, h_fin, c_fin


def init_encoder_params(key, input_dim, emb_dim, hid_dim, n_layers):
    """Deterministic parameter init mimicking PyTorch's shapes/init ranges."""
    params = {}
    key, k_emb = jax.random.split(key)
    params["embedding"] = jax.random.normal(
        k_emb, (input_dim, emb_dim), dtype=jnp.float32)  # N(0,1) like nn.Embedding

    stdv = 1.0 / jnp.sqrt(hid_dim)
    layers = []
    for layer in range(n_layers):
        in_size = emb_dim if layer == 0 else hid_dim
        key, k1, k2, k3, k4 = jax.random.split(key, 5)
        w_ih = jax.random.uniform(k1, (4 * hid_dim, in_size),
                                  minval=-stdv, maxval=stdv, dtype=jnp.float32)
        w_hh = jax.random.uniform(k2, (4 * hid_dim, hid_dim),
                                  minval=-stdv, maxval=stdv, dtype=jnp.float32)
        b_ih = jax.random.uniform(k3, (4 * hid_dim,),
                                  minval=-stdv, maxval=stdv, dtype=jnp.float32)
        b_hh = jax.random.uniform(k4, (4 * hid_dim,),
                                  minval=-stdv, maxval=stdv, dtype=jnp.float32)
        layers.append({
            "w_ih_t": w_ih.T,               # (in_size, 4H)
            "w_hh_t": w_hh.T,               # (H, 4H)
            "bias": b_ih + b_hh,            # (4H,)
        })
    params["layers"] = layers
    return params


@jax.jit
def encoder_forward(params, src):
    """src: (S, B) int32 token ids -> (hidden, cell) each (n_layers, B, H)."""
    # Embedding gather (glue) + dropout (identity in eval mode).
    x = params["embedding"][src]                    # (S, B, E) f32
    hiddens, cells = [], []
    for layer_p in params["layers"]:
        x, h_fin, c_fin = lstm_layer(
            x, layer_p["w_ih_t"], layer_p["w_hh_t"], layer_p["bias"])
        # inter-layer dropout would go here (identity in eval mode)
        hiddens.append(h_fin)
        cells.append(c_fin)
    hidden = jnp.stack(hiddens, axis=0)             # (n_layers, B, H)
    cell = jnp.stack(cells, axis=0)                 # (n_layers, B, H)
    return hidden, cell


def _reference_forward(params, src):
    """Pure-JAX f32 reference LSTM (PyTorch semantics) for correctness check."""
    x = params["embedding"][src]
    hiddens, cells = [], []
    for layer_p in params["layers"]:
        S, B, _ = x.shape
        H = layer_p["w_hh_t"].shape[0]
        h = jnp.zeros((B, H), jnp.float32)
        c = jnp.zeros((B, H), jnp.float32)
        outs = []
        for t in range(S):
            gates = (x[t] @ layer_p["w_ih_t"] + h @ layer_p["w_hh_t"]
                     + layer_p["bias"])
            i_g = jax.nn.sigmoid(gates[:, 0 * H:1 * H])
            f_g = jax.nn.sigmoid(gates[:, 1 * H:2 * H])
            g_g = jnp.tanh(gates[:, 2 * H:3 * H])
            o_g = jax.nn.sigmoid(gates[:, 3 * H:4 * H])
            c = f_g * c + i_g * g_g
            h = o_g * jnp.tanh(c)
            outs.append(h)
        x = jnp.stack(outs, axis=0)
        hiddens.append(h)
        cells.append(c)
    return jnp.stack(hiddens, 0), jnp.stack(cells, 0)


if __name__ == "__main__":
    # Small, deterministic config: vocab=50, emb=32, hid=32, layers=2, seq=8, batch=2.
    INPUT_DIM, EMB_DIM, HID_DIM, N_LAYERS = 50, 32, 32, 2
    SEQ_LEN, BATCH = 8, 2

    key = jax.random.PRNGKey(0)
    key, k_params, k_src = jax.random.split(key, 3)
    params = init_encoder_params(k_params, INPUT_DIM, EMB_DIM, HID_DIM, N_LAYERS)
    src = jax.random.randint(k_src, (SEQ_LEN, BATCH), 0, INPUT_DIM, dtype=jnp.int32)

    hidden, cell = encoder_forward(params, src)
    hidden, cell = jax.block_until_ready((hidden, cell))

    assert hidden.shape == (N_LAYERS, BATCH, HID_DIM), hidden.shape
    assert cell.shape == (N_LAYERS, BATCH, HID_DIM), cell.shape

    # Numerical sanity check against the pure-f32 JAX reference.
    # Tolerance is relaxed vs. 1e-5 because matmul operands are bf16
    # (f32 accumulation); observed error is ~1e-2 or below at these shapes.
    ref_h, ref_c = _reference_forward(params, src)
    err_h = float(jnp.max(jnp.abs(hidden - ref_h)))
    err_c = float(jnp.max(jnp.abs(cell - ref_c)))
    assert jnp.allclose(hidden, ref_h, atol=3e-2, rtol=3e-2), f"max|dh|={err_h}"
    assert jnp.allclose(cell, ref_c, atol=3e-2, rtol=3e-2), f"max|dc|={err_c}"

    print("KERNEL_OK")
</pallas_src>

<mosaic_0001>
module attributes {stable_mosaic.version = 11 : i64} {
  func.func @_lstm_recurrence_kernel(%arg0: i32, %arg1: memref<8x2x128xf32, #tpu.memory_space<vmem>>, %arg2: memref<32x128xbf16, #tpu.memory_space<vmem>>, %arg3: memref<8x2x32xf32, #tpu.memory_space<vmem>>, %arg4: memref<2x32xf32, #tpu.memory_space<vmem>>, %arg5: memref<2x32xf32, #tpu.memory_space<vmem>>) attributes {dimension_semantics = [#tpu.dimension_semantics<arbitrary>], iteration_bounds = array<i64: 1>, scalar_prefetch = 0 : i64, scratch_operands = 0 : i64, tpu.core_type = #tpu.core_type<tc>, window_params = [{transform_indices = @transform_0, window_bounds = array<i64: 8, 2, 128>}, {pipeline_mode = #tpu.pipeline_mode<synchronous>, transform_indices = @transform_1, window_bounds = array<i64: 32, 128>}, {transform_indices = @transform_2, window_bounds = array<i64: 8, 2, 32>}, {pipeline_mode = #tpu.pipeline_mode<synchronous>, transform_indices = @transform_3, window_bounds = array<i64: 2, 32>}, {pipeline_mode = #tpu.pipeline_mode<synchronous>, transform_indices = @transform_4, window_bounds = array<i64: 2, 32>}]} {
    %c0_i32 = arith.constant 0 : i32
    %0 = arith.cmpi eq, %arg0, %c0_i32 : i32
    %1 = arith.extui %0 : i1 to i32
    %c0_i32_0 = arith.constant 0 : i32
    %2 = arith.cmpi ne, %1, %c0_i32_0 : i32
    scf.if %2 {
      %cst = arith.constant 0.000000e+00 : f32
      %10 = vector.broadcast %cst : f32 to vector<2x32xf32>
      %c0_12 = arith.constant 0 : index
      %c0_13 = arith.constant 0 : index
      %11 = vector.load %arg4[%c0_12, %c0_13] : memref<2x32xf32, #tpu.memory_space<vmem>>, vector<2x32xf32>
      tpu.vector_store %arg4[%c0_12, %c0_13], %10 {strides = array<i32>} : memref<2x32xf32, #tpu.memory_space<vmem>>, vector<2x32xf32>,
      %cst_14 = arith.constant 0.000000e+00 : f32
      %12 = vector.broadcast %cst_14 : f32 to vector<2x32xf32>
      %c0_15 = arith.constant 0 : index
      %c0_16 = arith.constant 0 : index
      %13 = vector.load %arg5[%c0_15, %c0_16] : memref<2x32xf32, #tpu.memory_space<vmem>>, vector<2x32xf32>
      tpu.vector_store %arg5[%c0_15, %c0_16], %12 {strides = array<i32>} : memref<2x32xf32, #tpu.memory_space<vmem>>, vector<2x32xf32>,
    } else {
    }
    %c0 = arith.constant 0 : index
    %c0_1 = arith.constant 0 : index
    %3 = vector.load %arg2[%c0, %c0_1] : memref<32x128xbf16, #tpu.memory_space<vmem>>, vector<32x128xbf16>
    %c0_2 = arith.constant 0 : index
    %c0_3 = arith.constant 0 : index
    %4 = vector.load %arg4[%c0_2, %c0_3] : memref<2x32xf32, #tpu.memory_space<vmem>>, vector<2x32xf32>
    %c0_4 = arith.constant 0 : index
    %c0_5 = arith.constant 0 : index
    %5 = vector.load %arg5[%c0_4, %c0_5] : memref<2x32xf32, #tpu.memory_space<vmem>>, vector<2x32xf32>
    %c0_i32_6 = arith.constant 0 : i32
    %c8_i32 = arith.constant 8 : i32
    %6 = arith.addi %c0_i32_6, %c8_i32 : i32
    %c1_i32 = arith.constant 1 : i32
    %7:2 = scf.for %arg6 = %c0_i32_6 to %6 step %c1_i32 iter_args(%arg7 = %4, %arg8 = %5) -> (vector<2x32xf32>, vector<2x32xf32>)  : i32 {
      %10 = arith.index_cast %arg6 : i32 to index
      %c0_12 = arith.constant 0 : index
      %c0_13 = arith.constant 0 : index
      %11 = vector.load %arg1[%10, %c0_12, %c0_13] : memref<8x2x128xf32, #tpu.memory_space<vmem>>, vector<1x2x128xf32>
      %12 = vector.shape_cast %11 : vector<1x2x128xf32> to vector<2x128xf32>
      %13 = arith.truncf %arg7 : vector<2x32xf32> to vector<2x32xbf16>
      %cst = arith.constant dense<0.000000e+00> : vector<2x128xf32>
      %14 = tpu.matmul %13, %3, %cst {dimension_numbers = #tpu.dot_dimension_numbers<[1], [0], [0], [1], [0, 0, 1, 1], [], []>} : vector<2x32xbf16>, vector<32x128xbf16>, vector<2x128xf32> -> vector<2x128xf32>
      %15 = arith.addf %12, %14 : vector<2x128xf32>
      %16 = vector.extract_strided_slice %15 {offsets = [0, 0], sizes = [2, 32], strides = [1, 1]} : vector<2x128xf32> to vector<2x32xf32>
      %17 = arith.negf %16 : vector<2x32xf32>
      %18 = math.exp %17 : vector<2x32xf32>
      %cst_14 = arith.constant 1.000000e+00 : f32
      %19 = vector.broadcast %cst_14 : f32 to vector<2x32xf32>
      %20 = arith.addf %19, %18 : vector<2x32xf32>
      %21 = arith.divf %19, %20 : vector<2x32xf32>
      %22 = vector.extract_strided_slice %15 {offsets = [0, 32], sizes = [2, 32], strides = [1, 1]} : vector<2x128xf32> to vector<2x32xf32>
      %23 = arith.negf %22 : vector<2x32xf32>
      %24 = math.exp %23 : vector<2x32xf32>
      %cst_15 = arith.constant 1.000000e+00 : f32
      %25 = vector.broadcast %cst_15 : f32 to vector<2x32xf32>
      %26 = arith.addf %25, %24 : vector<2x32xf32>
      %27 = arith.divf %25, %26 : vector<2x32xf32>
      %28 = vector.extract_strided_slice %15 {offsets = [0, 64], sizes = [2, 32], strides = [1, 1]} : vector<2x128xf32> to vector<2x32xf32>
      %29 = math.tanh %28 : vector<2x32xf32>
      %30 = vector.extract_strided_slice %15 {offsets = [0, 96], sizes = [2, 32], strides = [1, 1]} : vector<2x128xf32> to vector<2x32xf32>
      %31 = arith.negf %30 : vector<2x32xf32>
      %32 = math.exp %31 : vector<2x32xf32>
      %cst_16 = arith.constant 1.000000e+00 : f32
      %33 = vector.broadcast %cst_16 : f32 to vector<2x32xf32>
      %34 = arith.addf %33, %32 : vector<2x32xf32>
      %35 = arith.divf %33, %34 : vector<2x32xf32>
      %36 = arith.mulf %27, %arg8 : vector<2x32xf32>
      %37 = arith.mulf %21, %29 : vector<2x32xf32>
      %38 = arith.addf %36, %37 : vector<2x32xf32>
      %39 = math.tanh %38 : vector<2x32xf32>
      %40 = arith.mulf %35, %39 : vector<2x32xf32>
      %41 = arith.index_cast %arg6 : i32 to index
      %c0_17 = arith.constant 0 : index
      %c0_18 = arith.constant 0 : index
      %42 = vector.load %arg3[%41, %c0_17, %c0_18] : memref<8x2x32xf32, #tpu.memory_space<vmem>>, vector<1x2x32xf32>
      %43 = vector.shape_cast %42 : vector<1x2x32xf32> to vector<2x32xf32>
      %44 = vector.shape_cast %40 : vector<2x32xf32> to vector<1x2x32xf32>
      tpu.vector_store %arg3[%41, %c0_17, %c0_18], %44 {strides = array<i32>} : memref<8x2x32xf32, #tpu.memory_space<vmem>>, vector<1x2x32xf32>,
      scf.yield %40, %38 : vector<2x32xf32>, vector<2x32xf32>
    }
    %c8_i32_7 = arith.constant 8 : i32
    %c0_8 = arith.constant 0 : index
    %c0_9 = arith.constant 0 : index
    %8 = vector.load %arg4[%c0_8, %c0_9] : memref<2x32xf32, #tpu.memory_space<vmem>>, vector<2x32xf32>
    tpu.vector_store %arg4[%c0_8, %c0_9], %7#0 {strides = array<i32>} : memref<2x32xf32, #tpu.memory_space<vmem>>, vector<2x32xf32>,
    %c0_10 = arith.constant 0 : index
    %c0_11 = arith.constant 0 : index
    %9 = vector.load %arg5[%c0_10, %c0_11] : memref<2x32xf32, #tpu.memory_space<vmem>>, vector<2x32xf32>
    tpu.vector_store %arg5[%c0_10, %c0_11], %7#1 {strides = array<i32>} : memref<2x32xf32, #tpu.memory_space<vmem>>, vector<2x32xf32>,
    return
  }
  func.func @transform_0(%arg0: i32) -> (i32, i32, i32) {
    %c0_i32 = arith.constant 0 : i32
    %c0_i32_0 = arith.constant 0 : i32
    %c0_i32_1 = arith.constant 0 : i32
    return %arg0, %c0_i32, %c0_i32_0 : i32, i32, i32
  }
  func.func @transform_1(%arg0: i32) -> (i32, i32) {
    %c0_i32 = arith.constant 0 : i32
    %c0_i32_0 = arith.constant 0 : i32
    %c0_i32_1 = arith.constant 0 : i32
    return %c0_i32, %c0_i32_0 : i32, i32
  }
  func.func @transform_2(%arg0: i32) -> (i32, i32, i32) {
    %c0_i32 = arith.constant 0 : i32
    %c0_i32_0 = arith.constant 0 : i32
    %c0_i32_1 = arith.constant 0 : i32
    return %arg0, %c0_i32, %c0_i32_0 : i32, i32, i32
  }
  func.func @transform_3(%arg0: i32) -> (i32, i32) {
    %c0_i32 = arith.constant 0 : i32
    %c0_i32_0 = arith.constant 0 : i32
    %c0_i32_1 = arith.constant 0 : i32
    return %c0_i32, %c0_i32_0 : i32, i32
  }
  func.func @transform_4(%arg0: i32) -> (i32, i32) {
    %c0_i32 = arith.constant 0 : i32
    %c0_i32_0 = arith.constant 0 : i32
    %c0_i32_1 = arith.constant 0 : i32
    return %c0_i32, %c0_i32_0 : i32, i32
  }
}

module attributes {stable_mosaic.version = 11 : i64} {
  func.func @_lstm_recurrence_kernel(%arg0: i32, %arg1: memref<8x2x128xf32, #tpu.memory_space<vmem>>, %arg2: memref<32x128xbf16, #tpu.memory_space<vmem>>, %arg3: memref<8x2x32xf32, #tpu.memory_space<vmem>>, %arg4: memref<2x32xf32, #tpu.memory_space<vmem>>, %arg5: memref<2x32xf32, #tpu.memory_space<vmem>>) attributes {dimension_semantics = [#tpu.dimension_semantics<arbitrary>], iteration_bounds = array<i64: 1>, scalar_prefetch = 0 : i64, scratch_operands = 0 : i64, tpu.core_type = #tpu.core_type<tc>, window_params = [{transform_indices = @transform_0, window_bounds = array<i64: 8, 2, 128>}, {pipeline_mode = #tpu.pipeline_mode<synchronous>, transform_indices = @transform_1, window_bounds = array<i64: 32, 128>}, {transform_indices = @transform_2, window_bounds = array<i64: 8, 2, 32>}, {pipeline_mode = #tpu.pipeline_mode<synchronous>, transform_indices = @transform_3, window_bounds = array<i64: 2, 32>}, {pipeline_mode = #tpu.pipeline_mode<synchronous>, transform_indices = @transform_4, window_bounds = array<i64: 2, 32>}]} {
    %c0_i32 = arith.constant 0 : i32
    %0 = arith.cmpi eq, %arg0, %c0_i32 : i32
    %1 = arith.extui %0 : i1 to i32
    %c0_i32_0 = arith.constant 0 : i32
    %2 = arith.cmpi ne, %1, %c0_i32_0 : i32
    scf.if %2 {
      %cst = arith.constant 0.000000e+00 : f32
      %10 = vector.broadcast %cst : f32 to vector<2x32xf32>
      %c0_12 = arith.constant 0 : index
      %c0_13 = arith.constant 0 : index
      %11 = vector.load %arg4[%c0_12, %c0_13] : memref<2x32xf32, #tpu.memory_space<vmem>>, vector<2x32xf32>
      tpu.vector_store %arg4[%c0_12, %c0_13], %10 {strides = array<i32>} : memref<2x32xf32, #tpu.memory_space<vmem>>, vector<2x32xf32>,
      %cst_14 = arith.constant 0.000000e+00 : f32
      %12 = vector.broadcast %cst_14 : f32 to vector<2x32xf32>
      %c0_15 = arith.constant 0 : index
      %c0_16 = arith.constant 0 : index
      %13 = vector.load %arg5[%c0_15, %c0_16] : memref<2x32xf32, #tpu.memory_space<vmem>>, vector<2x32xf32>
      tpu.vector_store %arg5[%c0_15, %c0_16], %12 {strides = array<i32>} : memref<2x32xf32, #tpu.memory_space<vmem>>, vector<2x32xf32>,
    } else {
    }
    %c0 = arith.constant 0 : index
    %c0_1 = arith.constant 0 : index
    %3 = vector.load %arg2[%c0, %c0_1] : memref<32x128xbf16, #tpu.memory_space<vmem>>, vector<32x128xbf16>
    %c0_2 = arith.constant 0 : index
    %c0_3 = arith.constant 0 : index
    %4 = vector.load %arg4[%c0_2, %c0_3] : memref<2x32xf32, #tpu.memory_space<vmem>>, vector<2x32xf32>
    %c0_4 = arith.constant 0 : index
    %c0_5 = arith.constant 0 : index
    %5 = vector.load %arg5[%c0_4, %c0_5] : memref<2x32xf32, #tpu.memory_space<vmem>>, vector<2x32xf32>
    %c0_i32_6 = arith.constant 0 : i32
    %c8_i32 = arith.constant 8 : i32
    %6 = arith.addi %c0_i32_6, %c8_i32 : i32
    %c1_i32 = arith.constant 1 : i32
    %7:2 = scf.for %arg6 = %c0_i32_6 to %6 step %c1_i32 iter_args(%arg7 = %4, %arg8 = %5) -> (vector<2x32xf32>, vector<2x32xf32>)  : i32 {
      %10 = arith.index_cast %arg6 : i32 to index
      %c0_12 = arith.constant 0 : index
      %c0_13 = arith.constant 0 : index
      %11 = vector.load %arg1[%10, %c0_12, %c0_13] : memref<8x2x128xf32, #tpu.memory_space<vmem>>, vector<1x2x128xf32>
      %12 = vector.shape_cast %11 : vector<1x2x128xf32> to vector<2x128xf32>
      %13 = arith.truncf %arg7 : vector<2x32xf32> to vector<2x32xbf16>
      %cst = arith.constant dense<0.000000e+00> : vector<2x128xf32>
      %14 = tpu.matmul %13, %3, %cst {dimension_numbers = #tpu.dot_dimension_numbers<[1], [0], [0], [1], [0, 0, 1, 1], [], []>} : vector<2x32xbf16>, vector<32x128xbf16>, vector<2x128xf32> -> vector<2x128xf32>
      %15 = arith.addf %12, %14 : vector<2x128xf32>
      %16 = vector.extract_strided_slice %15 {offsets = [0, 0], sizes = [2, 32], strides = [1, 1]} : vector<2x128xf32> to vector<2x32xf32>
      %17 = arith.negf %16 : vector<2x32xf32>
      %18 = math.exp %17 : vector<2x32xf32>
      %cst_14 = arith.constant 1.000000e+00 : f32
      %19 = vector.broadcast %cst_14 : f32 to vector<2x32xf32>
      %20 = arith.addf %19, %18 : vector<2x32xf32>
      %21 = arith.divf %19, %20 : vector<2x32xf32>
      %22 = vector.extract_strided_slice %15 {offsets = [0, 32], sizes = [2, 32], strides = [1, 1]} : vector<2x128xf32> to vector<2x32xf32>
      %23 = arith.negf %22 : vector<2x32xf32>
      %24 = math.exp %23 : vector<2x32xf32>
      %cst_15 = arith.constant 1.000000e+00 : f32
      %25 = vector.broadcast %cst_15 : f32 to vector<2x32xf32>
      %26 = arith.addf %25, %24 : vector<2x32xf32>
      %27 = arith.divf %25, %26 : vector<2x32xf32>
      %28 = vector.extract_strided_slice %15 {offsets = [0, 64], sizes = [2, 32], strides = [1, 1]} : vector<2x128xf32> to vector<2x32xf32>
      %29 = math.tanh %28 : vector<2x32xf32>
      %30 = vector.extract_strided_slice %15 {offsets = [0, 96], sizes = [2, 32], strides = [1, 1]} : vector<2x128xf32> to vector<2x32xf32>
      %31 = arith.negf %30 : vector<2x32xf32>
      %32 = math.exp %31 : vector<2x32xf32>
      %cst_16 = arith.constant 1.000000e+00 : f32
      %33 = vector.broadcast %cst_16 : f32 to vector<2x32xf32>
      %34 = arith.addf %33, %32 : vector<2x32xf32>
      %35 = arith.divf %33, %34 : vector<2x32xf32>
      %36 = arith.mulf %27, %arg8 : vector<2x32xf32>
      %37 = arith.mulf %21, %29 : vector<2x32xf32>
      %38 = arith.addf %36, %37 : vector<2x32xf32>
      %39 = math.tanh %38 : vector<2x32xf32>
      %40 = arith.mulf %35, %39 : vector<2x32xf32>
      %41 = arith.index_cast %arg6 : i32 to index
      %c0_17 = arith.constant 0 : index
      %c0_18 = arith.constant 0 : index
      %42 = vector.load %arg3[%41, %c0_17, %c0_18] : memref<8x2x32xf32, #tpu.memory_space<vmem>>, vector<1x2x32xf32>
      %43 = vector.shape_cast %42 : vector<1x2x32xf32> to vector<2x32xf32>
      %44 = vector.shape_cast %40 : vector<2x32xf32> to vector<1x2x32xf32>
      tpu.vector_store %arg3[%41, %c0_17, %c0_18], %44 {strides = array<i32>} : memref<8x2x32xf32, #tpu.memory_space<vmem>>, vector<1x2x32xf32>,
      scf.yield %40, %38 : vector<2x32xf32>, vector<2x32xf32>
    }
    %c8_i32_7 = arith.constant 8 : i32
    %c0_8 = arith.constant 0 : index
    %c0_9 = arith.constant 0 : index
    %8 = vector.load %arg4[%c0_8, %c0_9] : memref<2x32xf32, #tpu.memory_space<vmem>>, vector<2x32xf32>
    tpu.vector_store %arg4[%c0_8, %c0_9], %7#0 {strides = array<i32>} : memref<2x32xf32, #tpu.memory_space<vmem>>, vector<2x32xf32>,
    %c0_10 = arith.constant 0 : index
    %c0_11 = arith.constant 0 : index
    %9 = vector.load %arg5[%c0_10, %c0_11] : memref<2x32xf32, #tpu.memory_space<vmem>>, vector<2x32xf32>
    tpu.vector_store %arg5[%c0_10, %c0_11], %7#1 {strides = array<i32>} : memref<2x32xf32, #tpu.memory_space<vmem>>, vector<2x32xf32>,
    return
  }
  func.func @transform_0(%arg0: i32) -> (i32, i32, i32) {
    %c0_i32 = arith.constant 0 : i32
    %c0_i32_0 = arith.constant 0 : i32
    %c0_i32_1 = arith.constant 0 : i32
    return %arg0, %c0_i32, %c0_i32_0 : i32, i32, i32
  }
  func.func @transform_1(%arg0: i32) -> (i32, i32) {
    %c0_i32 = arith.constant 0 : i32
    %c0_i32_0 = arith.constant 0 : i32
    %c0_i32_1 = arith.constant 0 : i32
    return %c0_i32, %c0_i32_0 : i32, i32
  }
  func.func @transform_2(%arg0: i32) -> (i32, i32, i32) {
    %c0_i32 = arith.constant 0 : i32
    %c0_i32_0 = arith.constant 0 : i32
    %c0_i32_1 = arith.constant 0 : i32
    return %arg0, %c0_i32, %c0_i32_0 : i32, i32, i32
  }
  func.func @transform_3(%arg0: i32) -> (i32, i32) {
    %c0_i32 = arith.constant 0 : i32
    %c0_i32_0 = arith.constant 0 : i32
    %c0_i32_1 = arith.constant 0 : i32
    return %c0_i32, %c0_i32_0 : i32, i32
  }
  func.func @transform_4(%arg0: i32) -> (i32, i32) {
    %c0_i32 = arith.constant 0 : i32
    %c0_i32_0 = arith.constant 0 : i32
    %c0_i32_1 = arith.constant 0 : i32
    return %c0_i32, %c0_i32_0 : i32, i32
  }
}

</mosaic_0001>

<llo_original>
// kernel: encoder_forward.2
$region0: #{encoder_forward.2}
  #allocation0 [shape = 'u32[]', space=smem, size = 0x4, offset = 0x4, fixed_abs, tag = 'smem constant byte address 0x4 - core index']
  #allocation1 [shape = 'u32[144,128]{1,0:T(1,128)}', space=vmem, size = 0x12000, scoped, tag = 'internal scratch']
  %s0 = inlined_call_operand.vmem [shape: f32[8,2,128], index: 0, kind: input, shape index: {}]
  %s1 = inlined_call_operand.vmem [shape: bf16[32,128], index: 1, kind: input, shape index: {}]
  %s2 = inlined_call_operand.vmem [shape: f32[8,2,32], index: 2, kind: output, shape index: {0}]
  %s3 = inlined_call_operand.vmem [shape: f32[2,32], index: 3, kind: output, shape index: {1}]
  %s4 = inlined_call_operand.vmem [shape: f32[2,32], index: 4, kind: output, shape index: {2}]
  %5 = xla_tuple %s2, %s3, %s4
  %s6 = sld [smem:[#allocation0]]
  $region45: #{encoder_forward.2} parent=0
    _
  %s8 = ssub.s32 1, %s6
  %s9 = scalar_select 0, %s8, %s6
  // Predicated region
  $region2: #{encoder_forward.2} parent=0 // pred_check
    _
  $region3: #{encoder_forward.2} parent=0 // pred_check_branch
    %11 = sbr.rel (0) target = $region5
  $region4: #{encoder_forward.2} parent=0 // pred_region
    _
  $region5: #{encoder_forward.2} parent=0 // pred_fallthru
    _
  // Predicated region
  $region6: #{encoder_forward.2} parent=0 // pred_check
    _
  $region7: #{encoder_forward.2} parent=0 // pred_check_branch
    %13 = sbr.rel (0) target = $region9
  $region8: #{encoder_forward.2} parent=0 // pred_region
    _
  $region9: #{encoder_forward.2} parent=0 // pred_fallthru
    _
  %p15 = scmp.eq.s32.totalorder 0, 0
  // Predicated region
  $region10: #{encoder_forward.2} parent=0 // pred_check
    %p16 = pneg %p15
  $region11: #{encoder_forward.2} parent=0 // pred_check_branch
    %18 = sbr.rel (%p16) target = $region13
  $region12: #{encoder_forward.2} parent=0 // pred_region
    %vm19 = vcmask 254976
    %20 = vst.msk [vmem:[%s3] sm:$0x3] %vm19, 0.0
    %21 = vst.msk [vmem:[%s4] sm:$0x3] %vm19, 0.0
  $region13: #{encoder_forward.2} parent=0 // pred_fallthru
    _
  %v22 = vld [vmem:[%s1] sm:$0xf]
  %v23 = vld [vmem:[%s1 + $0x4] sm:$0xf]
  %v24 = vld [vmem:[%s1 + $0x8] sm:$0xf]
  %v25 = vld [vmem:[%s1 + $0xc] sm:$0xf]
  %v26 = vld [vmem:[%s3] sm:$0x3]
  %v27 = vld [vmem:[%s4] sm:$0x3]
  loop: start=0, step=1, limit=8
  $region14: #{encoder_forward.2} parent=0 // loop_pre_header
    _
  $region15: #{encoder_forward.2} parent=0 // loop_header
    %s29 = sphi 0, %s33
    %p30 = scmp.ge.s32.totalorder %s29, 8
    %v34 = vphi %v26, %v127
    %v35 = vphi %v27, %v134
  $region16: #{encoder_forward.2} parent=0 // loop_header_branch
    %32 = sbr.rel (%p30) target = $region20
  $region17: #{encoder_forward.2} parent=0 // loop_body
    %s36 = smul.u32 %s29, 2
    %s37 = scalar_lea.vmem %s0, %s36
    %v38 = vld [vmem:[%s37] sm:$0x3]
    %v39 = vpack.c.bf16 %v34, %v34
    %v44 = vunpack.c.l.b16 %v22
    %v45 = vunpack.c.l.b16 %v23
    %v46 = vunpack.c.l.b16 %v24
    %v47 = vunpack.c.l.b16 %v25
    %v48 = vpack.c.b16 %v45, %v44
    %v49 = vpack.c.b16 %v47, %v46
    %vm52 = vcmask 261120
    %v54 = vsel %vm52, %v39, 0
    %56 = vmatprep.subr.bf16.mxu0 0
    %57 = vmatpush1.bf16.msra.mxu0 %v48
    %58 = vmatprep.subr.bf16.mxu0 0
    %59 = vmatpush1.bf16.msra.mxu0 %v49
    %60 = vmatprep.subr.bf16.mxu0 0
    %61 = vmatpush1.bf16.msra.mxu0 0
    %62 = vmatprep.subr.bf16.mxu0 0
    %63 = vmatpush1.bf16.msra.mxu0 0
    %64 = vmatprep.subr.bf16.mxu0 0
    %65 = vmatpush1.bf16.msra.mxu0 0
    %66 = vmatprep.subr.bf16.mxu0 0
    %67 = vmatpush1.bf16.msra.mxu0 0
    %68 = vmatprep.subr.bf16.mxu0 0
    %69 = vmatpush1.bf16.msra.mxu0 0
    %70 = vmatprep.subr.bf16.mxu0 0
    %71 = vmatpush1.bf16.msra.mxu0 0
    %72 = vmatprep.subr.bf16.mxu0 0
    %73 = vmatpush1.bf16.msra.mxu0 0
    %74 = vmatprep.subr.bf16.mxu0 0
    %75 = vmatpush1.bf16.msra.mxu0 0
    %76 = vmatprep.subr.bf16.mxu0 0
    %77 = vmatpush1.bf16.msra.mxu0 0
    %78 = vmatprep.subr.bf16.mxu0 0
    %79 = vmatpush1.bf16.msra.mxu0 0
    %80 = vmatprep.subr.bf16.mxu0 0
    %81 = vmatpush1.bf16.msra.mxu0 0
    %82 = vmatprep.subr.bf16.mxu0 0
    %83 = vmatpush1.bf16.msra.mxu0 0
    %84 = vmatprep.subr.bf16.mxu0 0
    %85 = vmatpush1.bf16.msra.mxu0 0
    %86 = vmatprep.subr.bf16.mxu0 0
    %87 = vmatpush1.bf16.msra.mxu0 0
    %88 = vmatprep.mubr.bf16.mxu0 0
    %89 = vmatmul.mubr.bf16.gmra.mrb[0].mxu0 %v54
    %v90 = vpop.f32.mrb[0].mxu0
    %v91 = vadd.f32 0.0, %v90
    %v92 = vpop.f32.mrb[0].mxu0
    %v93 = vpop.f32.mrb[0].mxu0
    %v94 = vpop.f32.mrb[0].mxu0
    %95 = vdwg.mxu0
    %v96 = vadd.f32 %v38, %v91
    %v97 = vxor.u32 %v96, 2147483648
    %v98 = vmul.f32 %v97, 1.442695
    %v99 = vpow.pop %v98
    %v100 = vadd.f32 %v99, 1.0
    %v101 = vrcp.pop %v100
    %v102 = vmul.f32 1.0, %v101
    %v103 = vtanh.pop %v96
    %105 = vrot.lane.b32.xlu0 %v35, 32
    %v106 = vpop.permute.xlu0 %105
    %v108 = vmul.f32 %v102, %v106
    %110 = vrot.lane.b32.xlu0 %v103, 64
    %v111 = vpop.permute.xlu0 %110
    %v113 = vmul.f32 %v102, %v111
    %115 = vrot.lane.b32.xlu0 %v113, 32
    %v116 = vpop.permute.xlu0 %115
    %v118 = vadd.f32 %v108, %v116
    %v119 = vtanh.pop %v118
    %121 = vrot.lane.b32.xlu0 %v119, 64
    %v122 = vpop.permute.xlu0 %121
    %v124 = vmul.f32 %v102, %v122
    %126 = vrot.lane.b32.xlu0 %v124, 32
    %v127 = vpop.permute.xlu0 %126
    %s129 = scalar_lea.vmem %s2, %s36
    %vm130 = vcmask 254976
    %131 = vst.msk [vmem:[%s129] sm:$0x3] %vm130, %v127
    %133 = vrot.lane.b32.xlu0 %v118, 96
    %v134 = vpop.permute.xlu0 %133
  $region18: #{encoder_forward.2} parent=0 // loop_footer
    %s33 = sadd.s32 1, %s29
  $region19: #{encoder_forward.2} parent=0 // loop_footer_branch
    %28 = sbr.rel target = $region15
  $region20: #{encoder_forward.2} parent=0 // loop_exit
    _
  %vm136 = vcmask 254976
  %137 = vst.msk [vmem:[%s3] sm:$0x3] %vm136, %v34
  %138 = vst.msk [vmem:[%s4] sm:$0x3] %vm136, %v35
  // Predicated region
  $region21: #{encoder_forward.2} parent=0 // pred_check
    _
  $region22: #{encoder_forward.2} parent=0 // pred_check_branch
    %140 = sbr.rel (0) target = $region24
  $region23: #{encoder_forward.2} parent=0 // pred_region
    _
  $region24: #{encoder_forward.2} parent=0 // pred_fallthru
    _
  // Predicated region
  $region25: #{encoder_forward.2} parent=0 // pred_check
    _
  $region26: #{encoder_forward.2} parent=0 // pred_check_branch
    %142 = sbr.rel (0) target = $region28
  $region27: #{encoder_forward.2} parent=0 // pred_region
    _
  $region28: #{encoder_forward.2} parent=0 // pred_fallthru
    _
  // Predicated region
  $region29: #{encoder_forward.2} parent=0 // pred_check
    _
  $region30: #{encoder_forward.2} parent=0 // pred_check_branch
    %144 = sbr.rel (0) target = $region32
  $region31: #{encoder_forward.2} parent=0 // pred_region
    _
  $region32: #{encoder_forward.2} parent=0 // pred_fallthru
    _
  // Predicated region
  $region33: #{encoder_forward.2} parent=0 // pred_check
    _
  $region34: #{encoder_forward.2} parent=0 // pred_check_branch
    %146 = sbr.rel (0) target = $region36
  $region35: #{encoder_forward.2} parent=0 // pred_region
    _
  $region36: #{encoder_forward.2} parent=0 // pred_fallthru
    _
  // Predicated region
  $region37: #{encoder_forward.2} parent=0 // pred_check
    _
  $region38: #{encoder_forward.2} parent=0 // pred_check_branch
    %148 = sbr.rel (0) target = $region40
  $region39: #{encoder_forward.2} parent=0 // pred_region
    _
  $region40: #{encoder_forward.2} parent=0 // pred_fallthru
    _
  // Predicated region
  $region41: #{encoder_forward.2} parent=0 // pred_check
    _
  $region42: #{encoder_forward.2} parent=0 // pred_check_branch
    %150 = sbr.rel (0) target = $region44
  $region43: #{encoder_forward.2} parent=0 // pred_region
    _
  $region44: #{encoder_forward.2} parent=0 // pred_fallthru
    _

// kernel: encoder_forward.3
$region0: #{encoder_forward.3}
  #allocation0 [shape = 'u32[]', space=smem, size = 0x4, offset = 0x4, fixed_abs, tag = 'smem constant byte address 0x4 - core index']
  #allocation1 [shape = 'u32[144,128]{1,0:T(1,128)}', space=vmem, size = 0x12000, scoped, tag = 'internal scratch']
  %s0 = inlined_call_operand.vmem [shape: f32[8,2,128], index: 0, kind: input, shape index: {}]
  %s1 = inlined_call_operand.vmem [shape: bf16[32,128], index: 1, kind: input, shape index: {}]
  %s2 = inlined_call_operand.hbm [shape: f32[8,2,32], index: 2, kind: output, shape index: {0}]
  %s3 = inlined_call_operand.vmem [shape: f32[2,32], index: 3, kind: output, shape index: {1}]
  %s4 = inlined_call_operand.vmem [shape: f32[2,32], index: 4, kind: output, shape index: {2}]
  %5 = xla_tuple %s2, %s3, %s4
  %s6 = sld [smem:[#allocation0]]
  $region45: #{encoder_forward.3} parent=0
    _
  %s8 = ssub.s32 1, %s6
  %s9 = scalar_select 0, %s8, %s6
  $region1: #{encoder_forward.3} parent=0
    #allocation2 [shape = 'u8[8192]{0}', space=vmem, size = 0x2000, scoped, tag = 'output window, operand 0, single buffered']
    #allocation3 [shape = 's32[1]{0}', space=sflag, size = 0x4, scoped, tag = 'scoped memory for encoder_forward.3']
    %10 = vsyncpa [#allocation3], 0
    // Predicated region
    $region2: #{encoder_forward.3} parent=1 // pred_check
      _
    $region3: #{encoder_forward.3} parent=1 // pred_check_branch
      %12 = sbr.rel (0) target = $region5
    $region4: #{encoder_forward.3} parent=1 // pred_region
      _
    $region5: #{encoder_forward.3} parent=1 // pred_fallthru
      _
    // Predicated region
    $region6: #{encoder_forward.3} parent=1 // pred_check
      _
    $region7: #{encoder_forward.3} parent=1 // pred_check_branch
      %14 = sbr.rel (0) target = $region9
    $region8: #{encoder_forward.3} parent=1 // pred_region
      _
    $region9: #{encoder_forward.3} parent=1 // pred_fallthru
      _
    %p16 = scmp.eq.s32.totalorder 0, 0
    // Predicated region
    $region10: #{encoder_forward.3} parent=1 // pred_check
      %p17 = pneg %p16
    $region11: #{encoder_forward.3} parent=1 // pred_check_branch
      %19 = sbr.rel (%p17) target = $region13
    $region12: #{encoder_forward.3} parent=1 // pred_region
      %vm20 = vcmask 254976
      %21 = vst.msk [vmem:[%s3] sm:$0x3] %vm20, 0.0
      %22 = vst.msk [vmem:[%s4] sm:$0x3] %vm20, 0.0
    $region13: #{encoder_forward.3} parent=1 // pred_fallthru
      _
    %v23 = vld [vmem:[%s1] sm:$0xf]
    %v24 = vld [vmem:[%s1 + $0x4] sm:$0xf]
    %v25 = vld [vmem:[%s1 + $0x8] sm:$0xf]
    %v26 = vld [vmem:[%s1 + $0xc] sm:$0xf]
    %v27 = vld [vmem:[%s3] sm:$0x3]
    %v28 = vld [vmem:[%s4] sm:$0x3]
    loop: start=0, step=1, limit=8
    $region14: #{encoder_forward.3} parent=1 // loop_pre_header
      _
    $region15: #{encoder_forward.3} parent=1 // loop_header
      %s30 = sphi 0, %s34
      %p31 = scmp.ge.s32.totalorder %s30, 8
      %v35 = vphi %v27, %v128
      %v36 = vphi %v28, %v135
    $region16: #{encoder_forward.3} parent=1 // loop_header_branch
      %33 = sbr.rel (%p31) target = $region20
    $region17: #{encoder_forward.3} parent=1 // loop_body
      %s37 = smul.u32 %s30, 2
      %s38 = scalar_lea.vmem %s0, %s37
      %v39 = vld [vmem:[%s38] sm:$0x3]
      %v40 = vpack.c.bf16 %v35, %v35
      %v45 = vunpack.c.l.b16 %v23
      %v46 = vunpack.c.l.b16 %v24
      %v47 = vunpack.c.l.b16 %v25
      %v48 = vunpack.c.l.b16 %v26
      %v49 = vpack.c.b16 %v46, %v45
      %v50 = vpack.c.b16 %v48, %v47
      %vm53 = vcmask 261120
      %v55 = vsel %vm53, %v40, 0
      %57 = vmatprep.subr.bf16.mxu0 0
      %58 = vmatpush1.bf16.msra.mxu0 %v49
      %59 = vmatprep.subr.bf16.mxu0 0
      %60 = vmatpush1.bf16.msra.mxu0 %v50
      %61 = vmatprep.subr.bf16.mxu0 0
      %62 = vmatpush1.bf16.msra.mxu0 0
      %63 = vmatprep.subr.bf16.mxu0 0
      %64 = vmatpush1.bf16.msra.mxu0 0
      %65 = vmatprep.subr.bf16.mxu0 0
      %66 = vmatpush1.bf16.msra.mxu0 0
      %67 = vmatprep.subr.bf16.mxu0 0
      %68 = vmatpush1.bf16.msra.mxu0 0
      %69 = vmatprep.subr.bf16.mxu0 0
      %70 = vmatpush1.bf16.msra.mxu0 0
      %71 = vmatprep.subr.bf16.mxu0 0
      %72 = vmatpush1.bf16.msra.mxu0 0
      %73 = vmatprep.subr.bf16.mxu0 0
      %74 = vmatpush1.bf16.msra.mxu0 0
      %75 = vmatprep.subr.bf16.mxu0 0
      %76 = vmatpush1.bf16.msra.mxu0 0
      %77 = vmatprep.subr.bf16.mxu0 0
      %78 = vmatpush1.bf16.msra.mxu0 0
      %79 = vmatprep.subr.bf16.mxu0 0
      %80 = vmatpush1.bf16.msra.mxu0 0
      %81 = vmatprep.subr.bf16.mxu0 0
      %82 = vmatpush1.bf16.msra.mxu0 0
      %83 = vmatprep.subr.bf16.mxu0 0
      %84 = vmatpush1.bf16.msra.mxu0 0
      %85 = vmatprep.subr.bf16.mxu0 0
      %86 = vmatpush1.bf16.msra.mxu0 0
      %87 = vmatprep.subr.bf16.mxu0 0
      %88 = vmatpush1.bf16.msra.mxu0 0
      %89 = vmatprep.mubr.bf16.mxu0 0
      %90 = vmatmul.mubr.bf16.gmra.mrb[0].mxu0 %v55
      %v91 = vpop.f32.mrb[0].mxu0
      %v92 = vadd.f32 0.0, %v91
      %v93 = vpop.f32.mrb[0].mxu0
      %v94 = vpop.f32.mrb[0].mxu0
      %v95 = vpop.f32.mrb[0].mxu0
      %96 = vdwg.mxu0
      %v97 = vadd.f32 %v39, %v92
      %v98 = vxor.u32 %v97, 2147483648
      %v99 = vmul.f32 %v98, 1.442695
      %v100 = vpow.pop %v99
      %v101 = vadd.f32 %v100, 1.0
      %v102 = vrcp.pop %v101
      %v103 = vmul.f32 1.0, %v102
      %v104 = vtanh.pop %v97
      %106 = vrot.lane.b32.xlu0 %v36, 32
      %v107 = vpop.permute.xlu0 %106
      %v109 = vmul.f32 %v103, %v107
      %111 = vrot.lane.b32.xlu0 %v104, 64
      %v112 = vpop.permute.xlu0 %111
      %v114 = vmul.f32 %v103, %v112
      %116 = vrot.lane.b32.xlu0 %v114, 32
      %v117 = vpop.permute.xlu0 %116
      %v119 = vadd.f32 %v109, %v117
      %v120 = vtanh.pop %v119
      %122 = vrot.lane.b32.xlu0 %v120, 64
      %v123 = vpop.permute.xlu0 %122
      %v125 = vmul.f32 %v103, %v123
      %127 = vrot.lane.b32.xlu0 %v125, 32
      %v128 = vpop.permute.xlu0 %127
      %s130 = scalar_lea.vmem [#allocation2], %s37
      %vm131 = vcmask 254976
      %132 = vst.msk [vmem:[%s130] sm:$0x3] %vm131, %v128
      %134 = vrot.lane.b32.xlu0 %v119, 96
      %v135 = vpop.permute.xlu0 %134
    $region18: #{encoder_forward.3} parent=1 // loop_footer
      %s34 = sadd.s32 1, %s30
    $region19: #{encoder_forward.3} parent=1 // loop_footer_branch
      %29 = sbr.rel target = $region15
    $region20: #{encoder_forward.3} parent=1 // loop_exit
      _
    %vm137 = vcmask 254976
    %138 = vst.msk [vmem:[%s3] sm:$0x3] %vm137, %v35
    %139 = vst.msk [vmem:[%s4] sm:$0x3] %vm137, %v36
    // Predicated region
    $region21: #{encoder_forward.3} parent=1 // pred_check
      _
    $region22: #{encoder_forward.3} parent=1 // pred_check_branch
      %141 = sbr.rel (0) target = $region24
    $region23: #{encoder_forward.3} parent=1 // pred_region
      %s143 = ssub.s32 256, 256
      %144 = vsyncadd [#allocation3], %s143
      %s145 = sshll.u32 [#allocation2], 4
      %s146 = int_to_ptr.vmem [resolvable:$true] %s145
      %151 = dma.vmem_to_hbm [thread:$0]  %s146, 256, %s2, [#allocation3], 32, 32, 2
    $region24: #{encoder_forward.3} parent=1 // pred_fallthru
      _
    // Predicated region
    $region25: #{encoder_forward.3} parent=1 // pred_check
      _
    $region26: #{encoder_forward.3} parent=1 // pred_check_branch
      %153 = sbr.rel (0) target = $region28
    $region27: #{encoder_forward.3} parent=1 // pred_region
      _
    $region28: #{encoder_forward.3} parent=1 // pred_fallthru
      _
    // Predicated region
    $region29: #{encoder_forward.3} parent=1 // pred_check
      _
    $region30: #{encoder_forward.3} parent=1 // pred_check_branch
      %155 = sbr.rel (0) target = $region32
    $region31: #{encoder_forward.3} parent=1 // pred_region
      _
    $region32: #{encoder_forward.3} parent=1 // pred_fallthru
      _
    // Predicated region
    $region33: #{encoder_forward.3} parent=1 // pred_check
      _
    $region34: #{encoder_forward.3} parent=1 // pred_check_branch
      %157 = sbr.rel (0) target = $region36
    $region35: #{encoder_forward.3} parent=1 // pred_region
      %158 = dma.done [#allocation3], 256
    $region36: #{encoder_forward.3} parent=1 // pred_fallthru
      _
    // Predicated region
    $region37: #{encoder_forward.3} parent=1 // pred_check
      _
    $region38: #{encoder_forward.3} parent=1 // pred_check_branch
      %160 = sbr.rel (0) target = $region40
    $region39: #{encoder_forward.3} parent=1 // pred_region
      _
    $region40: #{encoder_forward.3} parent=1 // pred_fallthru
      _
    // Predicated region
    $region41: #{encoder_forward.3} parent=1 // pred_check
      _
    $region42: #{encoder_forward.3} parent=1 // pred_check_branch
      %162 = sbr.rel (0) target = $region44
    $region43: #{encoder_forward.3} parent=1 // pred_region
      _
    $region44: #{encoder_forward.3} parent=1 // pred_fallthru
      _
    %163 = vsyncpa [#allocation3], 1

</llo_original>
